<compile_context>
chip_gen: v6e
topology: v6e:2x2x1
jax: 0.10.0
libtpu: 0.0.40
codegen_flags: <defaults>
</compile_context>

<pallas_src>
import jax
import jax.numpy as jnp
from jax.experimental import pallas as pl
from jax.experimental.pallas import tpu as pltpu


def _round_up(x, m):
    return ((x + m - 1) // m) * m


def _pca_kernel(x_ref, mu_ref, w_ref, o_ref):
    # (tm_p, P*D) tile: subtract the (1, P*D) tiled mean (VPU, hidden under
    # the HBM stream), then a single MXU matmul with f32 accumulation.
    xc = x_ref[...] - mu_ref[...]
    o_ref[...] = jnp.dot(
        xc, w_ref[...], preferred_element_type=jnp.float32
    ).astype(o_ref.dtype)


def _matmul_intensity_cap(itemsize):
    """Approximate per-chip matmul:HBM break-even (flops/byte), with margin."""
    try:
        kind = jax.devices()[0].device_kind.lower()
    except Exception:
        kind = ""
    if "v5 lite" in kind or "v5e" in kind:
        cap = 48.0        # ~(197/4) TF/s f32 MXU vs ~0.82 TB/s HBM
    elif "v6" in kind:
        cap = 150.0       # plenty of MXU slack on v6e
    else:
        cap = 64.0        # conservative default (v7x, v5p, v4, unknown)
    if itemsize == 2:     # bf16 operands: ~4x matmul throughput
        cap *= 4.0
    return cap


def pca_transform(x, mean_, components_, *,
                  target_block_bytes=16 << 20,
                  vmem_budget_bytes=32 << 20):
    """(X - mean_) @ components_.T via a tiled, lane-packed Pallas kernel."""
    n, d = x.shape
    k, d2 = components_.shape
    assert d == d2
    mean_ = jnp.reshape(mean_, (1, d))

    dtype = x.dtype
    itemsize = jnp.dtype(dtype).itemsize
    sub = 8 * max(1, 4 // itemsize)        # sublane unit: 8 f32 / 16 bf16 / 32 int8

    # ---- lane packing: K padded to a divisor of 128, P samples per packed row.
    if k <= 128:
        k_pad = pl.next_power_of_2(max(k, 1))   # divisor of 128
        pack = 128 // k_pad
    else:
        k_pad = _round_up(k, 128)
        pack = 1

    # MXU roofline guard (matters on v5e): packing inflates matmul flops by P.
    cap = _matmul_intensity_cap(itemsize)
    bytes_per_sample = (d + k_pad) * itemsize
    while pack > 1 and (2.0 * pack * d * k_pad) / bytes_per_sample > cap:
        pack //= 2
    # Resident-weight size guard (single-buffered); 12 MiB is safe on all gens.
    while pack > 1 and (pack * d) * (pack * k_pad) * itemsize > (12 << 20):
        pack //= 2

    dp, kp = pack * d, pack * k_pad

    # ---- resident operands (built once in the wrapper, no per-step work).
    comp = components_.astype(jnp.float32)
    if k_pad != k:
        comp = jnp.pad(comp, ((0, k_pad - k), (0, 0)))       # zero components
    comp_dk = comp.T                                          # (D, K_pad)
    if pack > 1:
        eye = jnp.eye(pack, dtype=jnp.float32)
        # Block-diagonal weight: W[p*D+j, q*K_pad+c] = (p==q) * comp_dk[j, c]
        w = jnp.einsum("pq,jc->pjqc", eye, comp_dk).reshape(dp, kp)
        mu = jnp.tile(mean_, (1, pack))
    else:
        w = comp_dk
        mu = mean_
    w = w.astype(dtype)
    mu = mu.astype(dtype)

    # ---- minimal row padding: only to the packing factor (plus a `sub` packed
    # row floor) — never to the full row tile, so no full-array pad copy when N
    # is already a multiple of the small pack factor.
    n_pad = _round_up(n, pack)
    if n_pad // pack < sub:
        n_pad = sub * pack
    xp = x
    if n_pad != n:
        xp = jnp.pad(xp, ((0, n_pad - n), (0, 0)))
    rows = n_pad // pack
    xp = xp.reshape(rows, dp)              # row-major sample packing (lane-dense)

    # ---- row-tile selection (packed rows).
    in_row = dp * itemsize
    out_row = kp * itemsize
    resident = dp * kp * itemsize + dp * itemsize
    cap_in = max(sub, target_block_bytes // in_row)                    # ~16 MiB blocks
    cap_budget = max(sub, (vmem_budget_bytes - resident) // (2 * (in_row + out_row)))
    cap_mega = _round_up(pl.cdiv(rows, 4), sub)   # >=4 grid steps when N allows (v7x)
    tm_p = max(sub, (min(cap_in, cap_budget, cap_mega) // sub) * sub)
    grid = (pl.cdiv(rows, tm_p),)

    working = 2 * tm_p * (in_row + out_row) + 2 * resident
    vmem_limit = int(min(50 << 20, max(32 << 20, working + (4 << 20))))

    cost = pl.CostEstimate(
        flops=2 * rows * dp * kp,
        transcendentals=0,
        bytes_accessed=rows * (in_row + out_row) + resident,
    )

    def build(single_buffer_residents):
        if single_buffer_residents:
            mu_spec = pl.BlockSpec((1, dp), lambda i: (0, 0),
                                   pipeline_mode=pl.Buffered(1))
            w_spec = pl.BlockSpec((dp, kp), lambda i: (0, 0),
                                  pipeline_mode=pl.Buffered(1))
        else:
            mu_spec = pl.BlockSpec((1, dp), lambda i: (0, 0))
            w_spec = pl.BlockSpec((dp, kp), lambda i: (0, 0))
        return pl.pallas_call(
            _pca_kernel,
            out_shape=jax.ShapeDtypeStruct((rows, kp), dtype),
            grid_spec=pltpu.PrefetchScalarGridSpec(
                num_scalar_prefetch=0,
                grid=grid,
                in_specs=[
                    pl.BlockSpec((tm_p, dp), lambda i: (i, 0)),   # streamed X tile
                    mu_spec,                                      # resident tiled mean
                    w_spec,                                       # resident weight
                ],
                out_specs=pl.BlockSpec((tm_p, kp), lambda i: (i, 0)),
            ),
            compiler_params=pltpu.CompilerParams(
                dimension_semantics=("parallel",),   # shards grid across TCs on v7x
                vmem_limit_bytes=vmem_limit,
            ),
            cost_estimate=cost,
        )

    try:
        out = build(True)(xp, mu, w)
    except Exception:
        # Fallback for jax versions without pipeline_mode=pl.Buffered support.
        out = build(False)(xp, mu, w)

    out = out.reshape(n_pad, k_pad)
    if n_pad != n or k_pad != k:
        out = out[:n, :k]
    return out


if __name__ == "__main__":
    key = jax.random.PRNGKey(0)
    k_fit, k_x1, k_x2 = jax.random.split(key, 3)

    D = 32
    # Deterministic "fit": mean_ / components_ from a synthetic training matrix
    # in plain JAX (glue), mirroring PCA.fit + svd_flip semantics.
    x_fit = jax.random.normal(k_fit, (64, D), dtype=jnp.float32)
    mean_ = jnp.mean(x_fit, axis=0, keepdims=True)                  # (1, D)
    z = x_fit - mean_
    u, s, vh = jnp.linalg.svd(z, full_matrices=False)
    max_abs_rows = jnp.argmax(jnp.abs(u), axis=0)
    signs = jnp.sign(u[max_abs_rows, jnp.arange(u.shape[1])])
    vh = vh * signs[:, None]

    def check(x, n_components):
        comp = vh[:n_components].astype(jnp.float32)                # (K, D)
        out = jax.block_until_ready(pca_transform(x, mean_, comp))
        ref = (x.astype(jnp.float32) - mean_) @ comp.T
        assert out.shape == ref.shape and out.dtype == x.dtype
        err = float(jnp.max(jnp.abs(out.astype(jnp.float32) - ref)))
        assert err < 1e-3, err

    # 1) canonical small case: K=8 -> lane-packed path (128-lane output slab).
    x1 = jax.random.normal(k_x1, (16, D), dtype=jnp.float32)
    check(x1, 8)

    # 2) N not a multiple of the pack factor: minimal pad + partial last block.
    x2 = jax.random.normal(k_x2, (300, D), dtype=jnp.float32)
    check(x2, 8)

    # 3) K that does not divide 128 -> K padded to 8, extra columns sliced off.
    check(x2, 5)

    print("KERNEL_OK")
</pallas_src>

<mosaic_0001>
module attributes {stable_mosaic.version = 11 : i64} {
  func.func @_pca_kernel(%arg0: i32, %arg1: memref<8x512xf32, #tpu.memory_space<vmem>>, %arg2: memref<1x512xf32, #tpu.memory_space<vmem>>, %arg3: memref<512x128xf32, #tpu.memory_space<vmem>>, %arg4: memref<8x128xf32, #tpu.memory_space<vmem>>) attributes {dimension_semantics = [#tpu.dimension_semantics<parallel>], iteration_bounds = array<i64: 1>, scalar_prefetch = 0 : i64, scratch_operands = 0 : i64, tpu.core_type = #tpu.core_type<tc>, window_params = [{transform_indices = @transform_0, window_bounds = array<i64: 8, 512>}, {pipeline_mode = #tpu.pipeline_mode<synchronous>, transform_indices = @transform_1, window_bounds = array<i64: 1, 512>}, {pipeline_mode = #tpu.pipeline_mode<synchronous>, transform_indices = @transform_2, window_bounds = array<i64: 512, 128>}, {transform_indices = @transform_3, window_bounds = array<i64: 8, 128>}]} {
    %c0 = arith.constant 0 : index
    %c0_0 = arith.constant 0 : index
    %0 = vector.load %arg1[%c0, %c0_0] : memref<8x512xf32, #tpu.memory_space<vmem>>, vector<8x512xf32>
    %c0_1 = arith.constant 0 : index
    %c0_2 = arith.constant 0 : index
    %1 = vector.load %arg2[%c0_1, %c0_2] : memref<1x512xf32, #tpu.memory_space<vmem>>, vector<1x512xf32>
    %2 = vector.broadcast %1 : vector<1x512xf32> to vector<8x512xf32>
    %3 = arith.subf %0, %2 : vector<8x512xf32>
    %c0_3 = arith.constant 0 : index
    %c0_4 = arith.constant 0 : index
    %4 = vector.load %arg3[%c0_3, %c0_4] : memref<512x128xf32, #tpu.memory_space<vmem>>, vector<512x128xf32>
    %cst = arith.constant dense<0.000000e+00> : vector<8x128xf32>
    %5 = tpu.matmul %3, %4, %cst {dimension_numbers = #tpu.dot_dimension_numbers<[1], [0], [0], [1], [0, 0, 1, 1], [], []>} : vector<8x512xf32>, vector<512x128xf32>, vector<8x128xf32> -> vector<8x128xf32>
    %c0_5 = arith.constant 0 : index
    %c0_6 = arith.constant 0 : index
    %6 = vector.load %arg4[%c0_5, %c0_6] : memref<8x128xf32, #tpu.memory_space<vmem>>, vector<8x128xf32>
    tpu.vector_store %arg4[%c0_5, %c0_6], %5 {strides = array<i32>} : memref<8x128xf32, #tpu.memory_space<vmem>>, vector<8x128xf32>,
    return
  }
  func.func @transform_0(%arg0: i32) -> (i32, i32) {
    %c0_i32 = arith.constant 0 : i32
    %c0_i32_0 = arith.constant 0 : i32
    return %arg0, %c0_i32 : i32, i32
  }
  func.func @transform_1(%arg0: i32) -> (i32, i32) {
    %c0_i32 = arith.constant 0 : i32
    %c0_i32_0 = arith.constant 0 : i32
    %c0_i32_1 = arith.constant 0 : i32
    return %c0_i32, %c0_i32_0 : i32, i32
  }
  func.func @transform_2(%arg0: i32) -> (i32, i32) {
    %c0_i32 = arith.constant 0 : i32
    %c0_i32_0 = arith.constant 0 : i32
    %c0_i32_1 = arith.constant 0 : i32
    return %c0_i32, %c0_i32_0 : i32, i32
  }
  func.func @transform_3(%arg0: i32) -> (i32, i32) {
    %c0_i32 = arith.constant 0 : i32
    %c0_i32_0 = arith.constant 0 : i32
    return %arg0, %c0_i32 : i32, i32
  }
}

module attributes {stable_mosaic.version = 11 : i64} {
  func.func @_pca_kernel(%arg0: i32, %arg1: memref<8x512xf32, #tpu.memory_space<vmem>>, %arg2: memref<1x512xf32, #tpu.memory_space<vmem>>, %arg3: memref<512x128xf32, #tpu.memory_space<vmem>>, %arg4: memref<8x128xf32, #tpu.memory_space<vmem>>) attributes {dimension_semantics = [#tpu.dimension_semantics<parallel>], iteration_bounds = array<i64: 1>, scalar_prefetch = 0 : i64, scratch_operands = 0 : i64, tpu.core_type = #tpu.core_type<tc>, window_params = [{transform_indices = @transform_0, window_bounds = array<i64: 8, 512>}, {pipeline_mode = #tpu.pipeline_mode<synchronous>, transform_indices = @transform_1, window_bounds = array<i64: 1, 512>}, {pipeline_mode = #tpu.pipeline_mode<synchronous>, transform_indices = @transform_2, window_bounds = array<i64: 512, 128>}, {transform_indices = @transform_3, window_bounds = array<i64: 8, 128>}]} {
    %c0 = arith.constant 0 : index
    %c0_0 = arith.constant 0 : index
    %0 = vector.load %arg1[%c0, %c0_0] : memref<8x512xf32, #tpu.memory_space<vmem>>, vector<8x512xf32>
    %c0_1 = arith.constant 0 : index
    %c0_2 = arith.constant 0 : index
    %1 = vector.load %arg2[%c0_1, %c0_2] : memref<1x512xf32, #tpu.memory_space<vmem>>, vector<1x512xf32>
    %2 = vector.broadcast %1 : vector<1x512xf32> to vector<8x512xf32>
    %3 = arith.subf %0, %2 : vector<8x512xf32>
    %c0_3 = arith.constant 0 : index
    %c0_4 = arith.constant 0 : index
    %4 = vector.load %arg3[%c0_3, %c0_4] : memref<512x128xf32, #tpu.memory_space<vmem>>, vector<512x128xf32>
    %cst = arith.constant dense<0.000000e+00> : vector<8x128xf32>
    %5 = tpu.matmul %3, %4, %cst {dimension_numbers = #tpu.dot_dimension_numbers<[1], [0], [0], [1], [0, 0, 1, 1], [], []>} : vector<8x512xf32>, vector<512x128xf32>, vector<8x128xf32> -> vector<8x128xf32>
    %c0_5 = arith.constant 0 : index
    %c0_6 = arith.constant 0 : index
    %6 = vector.load %arg4[%c0_5, %c0_6] : memref<8x128xf32, #tpu.memory_space<vmem>>, vector<8x128xf32>
    tpu.vector_store %arg4[%c0_5, %c0_6], %5 {strides = array<i32>} : memref<8x128xf32, #tpu.memory_space<vmem>>, vector<8x128xf32>,
    return
  }
  func.func @transform_0(%arg0: i32) -> (i32, i32) {
    %c0_i32 = arith.constant 0 : i32
    %c0_i32_0 = arith.constant 0 : i32
    return %arg0, %c0_i32 : i32, i32
  }
  func.func @transform_1(%arg0: i32) -> (i32, i32) {
    %c0_i32 = arith.constant 0 : i32
    %c0_i32_0 = arith.constant 0 : i32
    %c0_i32_1 = arith.constant 0 : i32
    return %c0_i32, %c0_i32_0 : i32, i32
  }
  func.func @transform_2(%arg0: i32) -> (i32, i32) {
    %c0_i32 = arith.constant 0 : i32
    %c0_i32_0 = arith.constant 0 : i32
    %c0_i32_1 = arith.constant 0 : i32
    return %c0_i32, %c0_i32_0 : i32, i32
  }
  func.func @transform_3(%arg0: i32) -> (i32, i32) {
    %c0_i32 = arith.constant 0 : i32
    %c0_i32_0 = arith.constant 0 : i32
    return %arg0, %c0_i32 : i32, i32
  }
}

</mosaic_0001>

<llo_original>
// kernel: tpu_custom_call.1
$region0: #{tpu_custom_call.1}
  #allocation0 [shape = 'u32[]', space=smem, size = 0x4, offset = 0x4, fixed_abs, tag = 'smem constant byte address 0x4 - core index']
  #allocation1 [shape = 'u32[144,128]{1,0:T(1,128)}', space=vmem, size = 0x12000, scoped, tag = 'internal scratch']
  %s0 = inlined_call_operand.hbm [shape: f32[8,512], index: 0, kind: input, shape index: {}]
  %s1 = inlined_call_operand.hbm [shape: f32[1,512], index: 1, kind: input, shape index: {}]
  %s2 = inlined_call_operand.hbm [shape: f32[512,128], index: 2, kind: input, shape index: {}]
  %s3 = inlined_call_operand.hbm [shape: f32[8,128], index: 3, kind: output, shape index: {}]
  %s4 = sld [smem:[#allocation0]]
  $region34: #{tpu_custom_call.1} parent=0
    _
  %s6 = ssub.s32 1, %s4
  %s7 = scalar_select 0, %s6, %s4
  $region1: #{tpu_custom_call.1} parent=0
    #allocation2 [shape = 'u8[16384]{0}', space=vmem, size = 0x4000, scoped, tag = 'input window, operand 0, single buffered']
    #allocation3 [shape = 's32[1]{0}', space=sflag, size = 0x4, scoped, tag = 'scoped memory for tpu_custom_call.1']
    #allocation4 [shape = 's32[1]{0}', space=sflag, size = 0x4, scoped, tag = 'scoped memory for tpu_custom_call.1']
    #allocation5 [shape = 'u8[2048]{0}', space=vmem, size = 0x800, scoped, tag = 'input window, operand 1, single buffered']
    #allocation6 [shape = 's32[1]{0}', space=sflag, size = 0x4, scoped, tag = 'scoped memory for tpu_custom_call.1']
    #allocation7 [shape = 'u8[262144]{0}', space=vmem, size = 0x40000, scoped, tag = 'input window, operand 2, single buffered']
    #allocation8 [shape = 'u8[4096]{0}', space=vmem, size = 0x1000, scoped, tag = 'output window, operand 0, single buffered']
    %8 = vsyncpa [#allocation3], 0
    %9 = vsyncpa [#allocation6], 0
    %10 = vsyncpa [#allocation4], 0
    // Predicated region
    $region2: #{tpu_custom_call.1} parent=1 // pred_check
      _
    $region3: #{tpu_custom_call.1} parent=1 // pred_check_branch
      %12 = sbr.rel (0) target = $region5
    $region4: #{tpu_custom_call.1} parent=1 // pred_region
      %s14 = ssub.s32 512, 512
      %15 = vsyncadd [#allocation3], %s14
      %s17 = sshll.u32 [#allocation2], 4
      %s18 = int_to_ptr.vmem [resolvable:$true] %s17
      %20 = dma.hbm_to_vmem [thread:$0]  %s0, 512, %s18, [#allocation3]
    $region5: #{tpu_custom_call.1} parent=1 // pred_fallthru
      _
    // Predicated region
    $region6: #{tpu_custom_call.1} parent=1 // pred_check
      _
    $region7: #{tpu_custom_call.1} parent=1 // pred_check_branch
      %22 = sbr.rel (0) target = $region9
    $region8: #{tpu_custom_call.1} parent=1 // pred_region
      %s24 = ssub.s32 64, 64
      %25 = vsyncadd [#allocation6], %s24
      %s27 = sshll.u32 [#allocation5], 4
      %s28 = int_to_ptr.vmem [resolvable:$true] %s27
      %30 = dma.hbm_to_vmem [thread:$0]  %s1, 64, %s28, [#allocation6]
    $region9: #{tpu_custom_call.1} parent=1 // pred_fallthru
      _
    // Predicated region
    $region10: #{tpu_custom_call.1} parent=1 // pred_check
      _
    $region11: #{tpu_custom_call.1} parent=1 // pred_check_branch
      %32 = sbr.rel (0) target = $region13
    $region12: #{tpu_custom_call.1} parent=1 // pred_region
      %s34 = ssub.s32 8192, 8192
      %35 = vsyncadd [#allocation6], %s34
      %s36 = sshll.u32 [#allocation7], 4
      %s37 = int_to_ptr.vmem [resolvable:$true] %s36
      %42 = dma.hbm_to_vmem [thread:$0]  %s2, 8192, %s37, [#allocation6], 128, 128, 8
    $region13: #{tpu_custom_call.1} parent=1 // pred_fallthru
      _
    // Predicated region
    $region14: #{tpu_custom_call.1} parent=1 // pred_check
      _
    $region15: #{tpu_custom_call.1} parent=1 // pred_check_branch
      %44 = sbr.rel (0) target = $region17
    $region16: #{tpu_custom_call.1} parent=1 // pred_region
      %45 = dma.done [#allocation3], 512
    $region17: #{tpu_custom_call.1} parent=1 // pred_fallthru
      _
    // Predicated region
    $region18: #{tpu_custom_call.1} parent=1 // pred_check
      _
    $region19: #{tpu_custom_call.1} parent=1 // pred_check_branch
      %47 = sbr.rel (0) target = $region21
    $region20: #{tpu_custom_call.1} parent=1 // pred_region
      %48 = dma.done [#allocation6], 64
    $region21: #{tpu_custom_call.1} parent=1 // pred_fallthru
      _
    // Predicated region
    $region22: #{tpu_custom_call.1} parent=1 // pred_check
      _
    $region23: #{tpu_custom_call.1} parent=1 // pred_check_branch
      %50 = sbr.rel (0) target = $region25
    $region24: #{tpu_custom_call.1} parent=1 // pred_region
      %51 = dma.done [#allocation6], 8192
    $region25: #{tpu_custom_call.1} parent=1 // pred_fallthru
      _
    %v52 = vld [vmem:[#allocation2] sm:$0xff]
    %v53 = vld [vmem:[#allocation2 + $0x8] sm:$0xff]
    %v54 = vld [vmem:[#allocation2 + $0x10] sm:$0xff]
    %v55 = vld [vmem:[#allocation2 + $0x18] sm:$0xff]
    %v56 = vld [vmem:[#allocation5] sm:$0xf]
    %v58 = vlaneseq
    %v59 = vshrl.u32 %v58, 7
    %v60 = vsub.s32 0, %v59
    %v61 = vrot.slane %v56, %v60
    %v62 = vlaneseq
    %v63 = vshrl.u32 %v62, 7
    %v64 = vsub.s32 1, %v63
    %v65 = vrot.slane %v56, %v64
    %v66 = vlaneseq
    %v67 = vshrl.u32 %v66, 7
    %v68 = vsub.s32 2, %v67
    %v69 = vrot.slane %v56, %v68
    %v70 = vlaneseq
    %v71 = vshrl.u32 %v70, 7
    %v72 = vsub.s32 3, %v71
    %v73 = vrot.slane %v56, %v72
    %v78 = vsub.f32 %v52, %v61
    %v79 = vsub.f32 %v53, %v65
    %v80 = vsub.f32 %v54, %v69
    %v81 = vsub.f32 %v55, %v73
    %v82 = vld [vmem:[#allocation7] sm:$0xff]
    %v83 = vld [vmem:[#allocation7 + $0x8] sm:$0xff]
    %v84 = vld [vmem:[#allocation7 + $0x10] sm:$0xff]
    %v85 = vld [vmem:[#allocation7 + $0x18] sm:$0xff]
    %v86 = vld [vmem:[#allocation7 + $0x20] sm:$0xff]
    %v87 = vld [vmem:[#allocation7 + $0x28] sm:$0xff]
    %v88 = vld [vmem:[#allocation7 + $0x30] sm:$0xff]
    %v89 = vld [vmem:[#allocation7 + $0x38] sm:$0xff]
    %v90 = vld [vmem:[#allocation7 + $0x40] sm:$0xff]
    %v91 = vld [vmem:[#allocation7 + $0x48] sm:$0xff]
    %v92 = vld [vmem:[#allocation7 + $0x50] sm:$0xff]
    %v93 = vld [vmem:[#allocation7 + $0x58] sm:$0xff]
    %v94 = vld [vmem:[#allocation7 + $0x60] sm:$0xff]
    %v95 = vld [vmem:[#allocation7 + $0x68] sm:$0xff]
    %v96 = vld [vmem:[#allocation7 + $0x70] sm:$0xff]
    %v97 = vld [vmem:[#allocation7 + $0x78] sm:$0xff]
    %v98 = vld [vmem:[#allocation7 + $0x80] sm:$0xff]
    %v99 = vld [vmem:[#allocation7 + $0x88] sm:$0xff]
    %v100 = vld [vmem:[#allocation7 + $0x90] sm:$0xff]
    %v101 = vld [vmem:[#allocation7 + $0x98] sm:$0xff]
    %v102 = vld [vmem:[#allocation7 + $0xa0] sm:$0xff]
    %v103 = vld [vmem:[#allocation7 + $0xa8] sm:$0xff]
    %v104 = vld [vmem:[#allocation7 + $0xb0] sm:$0xff]
    %v105 = vld [vmem:[#allocation7 + $0xb8] sm:$0xff]
    %v106 = vld [vmem:[#allocation7 + $0xc0] sm:$0xff]
    %v107 = vld [vmem:[#allocation7 + $0xc8] sm:$0xff]
    %v108 = vld [vmem:[#allocation7 + $0xd0] sm:$0xff]
    %v109 = vld [vmem:[#allocation7 + $0xd8] sm:$0xff]
    %v110 = vld [vmem:[#allocation7 + $0xe0] sm:$0xff]
    %v111 = vld [vmem:[#allocation7 + $0xe8] sm:$0xff]
    %v112 = vld [vmem:[#allocation7 + $0xf0] sm:$0xff]
    %v113 = vld [vmem:[#allocation7 + $0xf8] sm:$0xff]
    %v114 = vld [vmem:[#allocation7 + $0x100] sm:$0xff]
    %v115 = vld [vmem:[#allocation7 + $0x108] sm:$0xff]
    %v116 = vld [vmem:[#allocation7 + $0x110] sm:$0xff]
    %v117 = vld [vmem:[#allocation7 + $0x118] sm:$0xff]
    %v118 = vld [vmem:[#allocation7 + $0x120] sm:$0xff]
    %v119 = vld [vmem:[#allocation7 + $0x128] sm:$0xff]
    %v120 = vld [vmem:[#allocation7 + $0x130] sm:$0xff]
    %v121 = vld [vmem:[#allocation7 + $0x138] sm:$0xff]
    %v122 = vld [vmem:[#allocation7 + $0x140] sm:$0xff]
    %v123 = vld [vmem:[#allocation7 + $0x148] sm:$0xff]
    %v124 = vld [vmem:[#allocation7 + $0x150] sm:$0xff]
    %v125 = vld [vmem:[#allocation7 + $0x158] sm:$0xff]
    %v126 = vld [vmem:[#allocation7 + $0x160] sm:$0xff]
    %v127 = vld [vmem:[#allocation7 + $0x168] sm:$0xff]
    %v128 = vld [vmem:[#allocation7 + $0x170] sm:$0xff]
    %v129 = vld [vmem:[#allocation7 + $0x178] sm:$0xff]
    %v130 = vld [vmem:[#allocation7 + $0x180] sm:$0xff]
    %v131 = vld [vmem:[#allocation7 + $0x188] sm:$0xff]
    %v132 = vld [vmem:[#allocation7 + $0x190] sm:$0xff]
    %v133 = vld [vmem:[#allocation7 + $0x198] sm:$0xff]
    %v134 = vld [vmem:[#allocation7 + $0x1a0] sm:$0xff]
    %v135 = vld [vmem:[#allocation7 + $0x1a8] sm:$0xff]
    %v136 = vld [vmem:[#allocation7 + $0x1b0] sm:$0xff]
    %v137 = vld [vmem:[#allocation7 + $0x1b8] sm:$0xff]
    %v138 = vld [vmem:[#allocation7 + $0x1c0] sm:$0xff]
    %v139 = vld [vmem:[#allocation7 + $0x1c8] sm:$0xff]
    %v140 = vld [vmem:[#allocation7 + $0x1d0] sm:$0xff]
    %v141 = vld [vmem:[#allocation7 + $0x1d8] sm:$0xff]
    %v142 = vld [vmem:[#allocation7 + $0x1e0] sm:$0xff]
    %v143 = vld [vmem:[#allocation7 + $0x1e8] sm:$0xff]
    %v144 = vld [vmem:[#allocation7 + $0x1f0] sm:$0xff]
    %v145 = vld [vmem:[#allocation7 + $0x1f8] sm:$0xff]
    %146 = vmatprep.subr.mxu0 0.0
    %147 = vmatpush1.msra.mxu0 %v97
    %148 = vmatprep.subr.mxu0 0.0
    %149 = vmatpush1.msra.mxu0 %v96
    %150 = vmatprep.subr.mxu0 0.0
    %151 = vmatpush1.msra.mxu0 %v95
    %152 = vmatprep.subr.mxu0 0.0
    %153 = vmatpush1.msra.mxu0 %v94
    %154 = vmatprep.subr.mxu0 0.0
    %155 = vmatpush1.msra.mxu0 %v93
    %156 = vmatprep.subr.mxu0 0.0
    %157 = vmatpush1.msra.mxu0 %v92
    %158 = vmatprep.subr.mxu0 0.0
    %159 = vmatpush1.msra.mxu0 %v91
    %160 = vmatprep.subr.mxu0 0.0
    %161 = vmatpush1.msra.mxu0 %v90
    %162 = vmatprep.subr.mxu0 0.0
    %163 = vmatpush1.msra.mxu0 %v89
    %164 = vmatprep.subr.mxu0 0.0
    %165 = vmatpush1.msra.mxu0 %v88
    %166 = vmatprep.subr.mxu0 0.0
    %167 = vmatpush1.msra.mxu0 %v87
    %168 = vmatprep.subr.mxu0 0.0
    %169 = vmatpush1.msra.mxu0 %v86
    %170 = vmatprep.subr.mxu0 0.0
    %171 = vmatpush1.msra.mxu0 %v85
    %172 = vmatprep.subr.mxu0 0.0
    %173 = vmatpush1.msra.mxu0 %v84
    %174 = vmatprep.subr.mxu0 0.0
    %175 = vmatpush1.msra.mxu0 %v83
    %176 = vmatprep.subr.mxu0 0.0
    %177 = vmatpush1.msra.mxu0 %v82
    %178 = vmatprep.subr.mxu0 0.0
    %179 = vmatpush2.msra.mxu0 %v113
    %180 = vmatprep.subr.mxu0 0.0
    %181 = vmatpush2.msra.mxu0 %v112
    %182 = vmatprep.subr.mxu0 0.0
    %183 = vmatpush2.msra.mxu0 %v111
    %184 = vmatprep.subr.mxu0 0.0
    %185 = vmatpush2.msra.mxu0 %v110
    %186 = vmatprep.subr.mxu0 0.0
    %187 = vmatpush2.msra.mxu0 %v109
    %188 = vmatprep.subr.mxu0 0.0
    %189 = vmatpush2.msra.mxu0 %v108
    %190 = vmatprep.subr.mxu0 0.0
    %191 = vmatpush2.msra.mxu0 %v107
    %192 = vmatprep.subr.mxu0 0.0
    %193 = vmatpush2.msra.mxu0 %v106
    %194 = vmatprep.subr.mxu0 0.0
    %195 = vmatpush2.msra.mxu0 %v105
    %196 = vmatprep.subr.mxu0 0.0
    %197 = vmatpush2.msra.mxu0 %v104
    %198 = vmatprep.subr.mxu0 0.0
    %199 = vmatpush2.msra.mxu0 %v103
    %200 = vmatprep.subr.mxu0 0.0
    %201 = vmatpush2.msra.mxu0 %v102
    %202 = vmatprep.subr.mxu0 0.0
    %203 = vmatpush2.msra.mxu0 %v101
    %204 = vmatprep.subr.mxu0 0.0
    %205 = vmatpush2.msra.mxu0 %v100
    %206 = vmatprep.subr.mxu0 0.0
    %207 = vmatpush2.msra.mxu0 %v99
    %208 = vmatprep.subr.mxu0 0.0
    %209 = vmatpush2.msra.mxu0 %v98
    %210 = vmatprep.mubr.f32.mxu0 %v79
    %211 = vmatmul.mubr.f32.gmra.mxu0 %v78
    %v212 = vpop.f32.mrf.mxu0
    %v213 = vadd.f32 0.0, %v212
    %v214 = vpop.f32.mrf.mxu0
    %215 = vdwg.mxu0
    %216 = vmatprep.subr.mxu0 0.0
    %217 = vmatpush1.msra.mxu0 %v129
    %218 = vmatprep.subr.mxu0 0.0
    %219 = vmatpush1.msra.mxu0 %v128
    %220 = vmatprep.subr.mxu0 0.0
    %221 = vmatpush1.msra.mxu0 %v127
    %222 = vmatprep.subr.mxu0 0.0
    %223 = vmatpush1.msra.mxu0 %v126
    %224 = vmatprep.subr.mxu0 0.0
    %225 = vmatpush1.msra.mxu0 %v125
    %226 = vmatprep.subr.mxu0 0.0
    %227 = vmatpush1.msra.mxu0 %v124
    %228 = vmatprep.subr.mxu0 0.0
    %229 = vmatpush1.msra.mxu0 %v123
    %230 = vmatprep.subr.mxu0 0.0
    %231 = vmatpush1.msra.mxu0 %v122
    %232 = vmatprep.subr.mxu0 0.0
    %233 = vmatpush1.msra.mxu0 %v121
    %234 = vmatprep.subr.mxu0 0.0
    %235 = vmatpush1.msra.mxu0 %v120
    %236 = vmatprep.subr.mxu0 0.0
    %237 = vmatpush1.msra.mxu0 %v119
    %238 = vmatprep.subr.mxu0 0.0
    %239 = vmatpush1.msra.mxu0 %v118
    %240 = vmatprep.subr.mxu0 0.0
    %241 = vmatpush1.msra.mxu0 %v117
    %242 = vmatprep.subr.mxu0 0.0
    %243 = vmatpush1.msra.mxu0 %v116
    %244 = vmatprep.subr.mxu0 0.0
    %245 = vmatpush1.msra.mxu0 %v115
    %246 = vmatprep.subr.mxu0 0.0
    %247 = vmatpush1.msra.mxu0 %v114
    %248 = vmatprep.subr.mxu0 0.0
    %249 = vmatpush2.msra.mxu0 %v145
    %250 = vmatprep.subr.mxu0 0.0
    %251 = vmatpush2.msra.mxu0 %v144
    %252 = vmatprep.subr.mxu0 0.0
    %253 = vmatpush2.msra.mxu0 %v143
    %254 = vmatprep.subr.mxu0 0.0
    %255 = vmatpush2.msra.mxu0 %v142
    %256 = vmatprep.subr.mxu0 0.0
    %257 = vmatpush2.msra.mxu0 %v141
    %258 = vmatprep.subr.mxu0 0.0
    %259 = vmatpush2.msra.mxu0 %v140
    %260 = vmatprep.subr.mxu0 0.0
    %261 = vmatpush2.msra.mxu0 %v139
    %262 = vmatprep.subr.mxu0 0.0
    %263 = vmatpush2.msra.mxu0 %v138
    %264 = vmatprep.subr.mxu0 0.0
    %265 = vmatpush2.msra.mxu0 %v137
    %266 = vmatprep.subr.mxu0 0.0
    %267 = vmatpush2.msra.mxu0 %v136
    %268 = vmatprep.subr.mxu0 0.0
    %269 = vmatpush2.msra.mxu0 %v135
    %270 = vmatprep.subr.mxu0 0.0
    %271 = vmatpush2.msra.mxu0 %v134
    %272 = vmatprep.subr.mxu0 0.0
    %273 = vmatpush2.msra.mxu0 %v133
    %274 = vmatprep.subr.mxu0 0.0
    %275 = vmatpush2.msra.mxu0 %v132
    %276 = vmatprep.subr.mxu0 0.0
    %277 = vmatpush2.msra.mxu0 %v131
    %278 = vmatprep.subr.mxu0 0.0
    %279 = vmatpush2.msra.mxu0 %v130
    %280 = vmatprep.mubr.f32.mxu0 %v81
    %281 = vmatmul.mubr.f32.gmra.mxu0 %v80
    %v282 = vpop.f32.mrf.mxu0
    %v283 = vadd.f32 %v213, %v282
    %v284 = vpop.f32.mrf.mxu0
    %285 = vdwg.mxu0
    %286 = vst [vmem:[#allocation8] sm:$0xff] %v283
    // Predicated region
    $region26: #{tpu_custom_call.1} parent=1 // pred_check
      _
    $region27: #{tpu_custom_call.1} parent=1 // pred_check_branch
      %288 = sbr.rel (0) target = $region29
    $region28: #{tpu_custom_call.1} parent=1 // pred_region
      %s290 = ssub.s32 128, 128
      %291 = vsyncadd [#allocation4], %s290
      %s293 = sshll.u32 [#allocation8], 4
      %s294 = int_to_ptr.vmem [resolvable:$true] %s293
      %296 = dma.vmem_to_hbm [thread:$0]  %s294, 128, %s3, [#allocation4]
    $region29: #{tpu_custom_call.1} parent=1 // pred_fallthru
      _
    // Predicated region
    $region30: #{tpu_custom_call.1} parent=1 // pred_check
      _
    $region31: #{tpu_custom_call.1} parent=1 // pred_check_branch
      %298 = sbr.rel (0) target = $region33
    $region32: #{tpu_custom_call.1} parent=1 // pred_region
      %299 = dma.done [#allocation4], 128
    $region33: #{tpu_custom_call.1} parent=1 // pred_fallthru
      _
    %300 = vsyncpa [#allocation3], 1
    %301 = vsyncpa [#allocation6], 1
    %302 = vsyncpa [#allocation4], 1

// kernel: tpu_custom_call.1
$region0: #{tpu_custom_call.1}
  #allocation0 [shape = 'u32[]', space=smem, size = 0x4, offset = 0x4, fixed_abs, tag = 'smem constant byte address 0x4 - core index']
  #allocation1 [shape = 'u32[144,128]{1,0:T(1,128)}', space=vmem, size = 0x12000, scoped, tag = 'internal scratch']
  %s0 = inlined_call_operand.hbm [shape: f32[8,512], index: 0, kind: input, shape index: {}]
  %s1 = inlined_call_operand.hbm [shape: f32[1,512], index: 1, kind: input, shape index: {}]
  %s2 = inlined_call_operand.hbm [shape: f32[512,128], index: 2, kind: input, shape index: {}]
  %s3 = inlined_call_operand.hbm [shape: f32[8,128], index: 3, kind: output, shape index: {}]
  %s4 = sld [smem:[#allocation0]]
  $region34: #{tpu_custom_call.1} parent=0
    _
  %s6 = ssub.s32 1, %s4
  %s7 = scalar_select 0, %s6, %s4
  $region1: #{tpu_custom_call.1} parent=0
    #allocation2 [shape = 'u8[16384]{0}', space=vmem, size = 0x4000, scoped, tag = 'input window, operand 0, single buffered']
    #allocation3 [shape = 's32[1]{0}', space=sflag, size = 0x4, scoped, tag = 'scoped memory for tpu_custom_call.1']
    #allocation4 [shape = 's32[1]{0}', space=sflag, size = 0x4, scoped, tag = 'scoped memory for tpu_custom_call.1']
    #allocation5 [shape = 'u8[2048]{0}', space=vmem, size = 0x800, scoped, tag = 'input window, operand 1, single buffered']
    #allocation6 [shape = 's32[1]{0}', space=sflag, size = 0x4, scoped, tag = 'scoped memory for tpu_custom_call.1']
    #allocation7 [shape = 'u8[262144]{0}', space=vmem, size = 0x40000, scoped, tag = 'input window, operand 2, single buffered']
    #allocation8 [shape = 'u8[4096]{0}', space=vmem, size = 0x1000, scoped, tag = 'output window, operand 0, single buffered']
    %8 = vsyncpa [#allocation3], 0
    %9 = vsyncpa [#allocation6], 0
    %10 = vsyncpa [#allocation4], 0
    // Predicated region
    $region2: #{tpu_custom_call.1} parent=1 // pred_check
      _
    $region3: #{tpu_custom_call.1} parent=1 // pred_check_branch
      %12 = sbr.rel (0) target = $region5
    $region4: #{tpu_custom_call.1} parent=1 // pred_region
      %s14 = ssub.s32 512, 512
      %15 = vsyncadd [#allocation3], %s14
      %s17 = sshll.u32 [#allocation2], 4
      %s18 = int_to_ptr.vmem [resolvable:$true] %s17
      %20 = dma.hbm_to_vmem [thread:$0]  %s0, 512, %s18, [#allocation3]
    $region5: #{tpu_custom_call.1} parent=1 // pred_fallthru
      _
    // Predicated region
    $region6: #{tpu_custom_call.1} parent=1 // pred_check
      _
    $region7: #{tpu_custom_call.1} parent=1 // pred_check_branch
      %22 = sbr.rel (0) target = $region9
    $region8: #{tpu_custom_call.1} parent=1 // pred_region
      %s24 = ssub.s32 64, 64
      %25 = vsyncadd [#allocation6], %s24
      %s27 = sshll.u32 [#allocation5], 4
      %s28 = int_to_ptr.vmem [resolvable:$true] %s27
      %30 = dma.hbm_to_vmem [thread:$0]  %s1, 64, %s28, [#allocation6]
    $region9: #{tpu_custom_call.1} parent=1 // pred_fallthru
      _
    // Predicated region
    $region10: #{tpu_custom_call.1} parent=1 // pred_check
      _
    $region11: #{tpu_custom_call.1} parent=1 // pred_check_branch
      %32 = sbr.rel (0) target = $region13
    $region12: #{tpu_custom_call.1} parent=1 // pred_region
      %s34 = ssub.s32 8192, 8192
      %35 = vsyncadd [#allocation6], %s34
      %s36 = sshll.u32 [#allocation7], 4
      %s37 = int_to_ptr.vmem [resolvable:$true] %s36
      %42 = dma.hbm_to_vmem [thread:$0]  %s2, 8192, %s37, [#allocation6], 128, 128, 8
    $region13: #{tpu_custom_call.1} parent=1 // pred_fallthru
      _
    // Predicated region
    $region14: #{tpu_custom_call.1} parent=1 // pred_check
      _
    $region15: #{tpu_custom_call.1} parent=1 // pred_check_branch
      %44 = sbr.rel (0) target = $region17
    $region16: #{tpu_custom_call.1} parent=1 // pred_region
      %45 = dma.done [#allocation3], 512
    $region17: #{tpu_custom_call.1} parent=1 // pred_fallthru
      _
    // Predicated region
    $region18: #{tpu_custom_call.1} parent=1 // pred_check
      _
    $region19: #{tpu_custom_call.1} parent=1 // pred_check_branch
      %47 = sbr.rel (0) target = $region21
    $region20: #{tpu_custom_call.1} parent=1 // pred_region
      %48 = dma.done [#allocation6], 64
    $region21: #{tpu_custom_call.1} parent=1 // pred_fallthru
      _
    // Predicated region
    $region22: #{tpu_custom_call.1} parent=1 // pred_check
      _
    $region23: #{tpu_custom_call.1} parent=1 // pred_check_branch
      %50 = sbr.rel (0) target = $region25
    $region24: #{tpu_custom_call.1} parent=1 // pred_region
      %51 = dma.done [#allocation6], 8192
    $region25: #{tpu_custom_call.1} parent=1 // pred_fallthru
      _
    %v52 = vld [vmem:[#allocation2] sm:$0xff]
    %v53 = vld [vmem:[#allocation2 + $0x8] sm:$0xff]
    %v54 = vld [vmem:[#allocation2 + $0x10] sm:$0xff]
    %v55 = vld [vmem:[#allocation2 + $0x18] sm:$0xff]
    %v56 = vld [vmem:[#allocation5] sm:$0xf]
    %v58 = vlaneseq
    %v59 = vshrl.u32 %v58, 7
    %v60 = vsub.s32 0, %v59
    %v61 = vrot.slane %v56, %v60
    %v62 = vlaneseq
    %v63 = vshrl.u32 %v62, 7
    %v64 = vsub.s32 1, %v63
    %v65 = vrot.slane %v56, %v64
    %v66 = vlaneseq
    %v67 = vshrl.u32 %v66, 7
    %v68 = vsub.s32 2, %v67
    %v69 = vrot.slane %v56, %v68
    %v70 = vlaneseq
    %v71 = vshrl.u32 %v70, 7
    %v72 = vsub.s32 3, %v71
    %v73 = vrot.slane %v56, %v72
    %v78 = vsub.f32 %v52, %v61
    %v79 = vsub.f32 %v53, %v65
    %v80 = vsub.f32 %v54, %v69
    %v81 = vsub.f32 %v55, %v73
    %v82 = vld [vmem:[#allocation7] sm:$0xff]
    %v83 = vld [vmem:[#allocation7 + $0x8] sm:$0xff]
    %v84 = vld [vmem:[#allocation7 + $0x10] sm:$0xff]
    %v85 = vld [vmem:[#allocation7 + $0x18] sm:$0xff]
    %v86 = vld [vmem:[#allocation7 + $0x20] sm:$0xff]
    %v87 = vld [vmem:[#allocation7 + $0x28] sm:$0xff]
    %v88 = vld [vmem:[#allocation7 + $0x30] sm:$0xff]
    %v89 = vld [vmem:[#allocation7 + $0x38] sm:$0xff]
    %v90 = vld [vmem:[#allocation7 + $0x40] sm:$0xff]
    %v91 = vld [vmem:[#allocation7 + $0x48] sm:$0xff]
    %v92 = vld [vmem:[#allocation7 + $0x50] sm:$0xff]
    %v93 = vld [vmem:[#allocation7 + $0x58] sm:$0xff]
    %v94 = vld [vmem:[#allocation7 + $0x60] sm:$0xff]
    %v95 = vld [vmem:[#allocation7 + $0x68] sm:$0xff]
    %v96 = vld [vmem:[#allocation7 + $0x70] sm:$0xff]
    %v97 = vld [vmem:[#allocation7 + $0x78] sm:$0xff]
    %v98 = vld [vmem:[#allocation7 + $0x80] sm:$0xff]
    %v99 = vld [vmem:[#allocation7 + $0x88] sm:$0xff]
    %v100 = vld [vmem:[#allocation7 + $0x90] sm:$0xff]
    %v101 = vld [vmem:[#allocation7 + $0x98] sm:$0xff]
    %v102 = vld [vmem:[#allocation7 + $0xa0] sm:$0xff]
    %v103 = vld [vmem:[#allocation7 + $0xa8] sm:$0xff]
    %v104 = vld [vmem:[#allocation7 + $0xb0] sm:$0xff]
    %v105 = vld [vmem:[#allocation7 + $0xb8] sm:$0xff]
    %v106 = vld [vmem:[#allocation7 + $0xc0] sm:$0xff]
    %v107 = vld [vmem:[#allocation7 + $0xc8] sm:$0xff]
    %v108 = vld [vmem:[#allocation7 + $0xd0] sm:$0xff]
    %v109 = vld [vmem:[#allocation7 + $0xd8] sm:$0xff]
    %v110 = vld [vmem:[#allocation7 + $0xe0] sm:$0xff]
    %v111 = vld [vmem:[#allocation7 + $0xe8] sm:$0xff]
    %v112 = vld [vmem:[#allocation7 + $0xf0] sm:$0xff]
    %v113 = vld [vmem:[#allocation7 + $0xf8] sm:$0xff]
    %v114 = vld [vmem:[#allocation7 + $0x100] sm:$0xff]
    %v115 = vld [vmem:[#allocation7 + $0x108] sm:$0xff]
    %v116 = vld [vmem:[#allocation7 + $0x110] sm:$0xff]
    %v117 = vld [vmem:[#allocation7 + $0x118] sm:$0xff]
    %v118 = vld [vmem:[#allocation7 + $0x120] sm:$0xff]
    %v119 = vld [vmem:[#allocation7 + $0x128] sm:$0xff]
    %v120 = vld [vmem:[#allocation7 + $0x130] sm:$0xff]
    %v121 = vld [vmem:[#allocation7 + $0x138] sm:$0xff]
    %v122 = vld [vmem:[#allocation7 + $0x140] sm:$0xff]
    %v123 = vld [vmem:[#allocation7 + $0x148] sm:$0xff]
    %v124 = vld [vmem:[#allocation7 + $0x150] sm:$0xff]
    %v125 = vld [vmem:[#allocation7 + $0x158] sm:$0xff]
    %v126 = vld [vmem:[#allocation7 + $0x160] sm:$0xff]
    %v127 = vld [vmem:[#allocation7 + $0x168] sm:$0xff]
    %v128 = vld [vmem:[#allocation7 + $0x170] sm:$0xff]
    %v129 = vld [vmem:[#allocation7 + $0x178] sm:$0xff]
    %v130 = vld [vmem:[#allocation7 + $0x180] sm:$0xff]
    %v131 = vld [vmem:[#allocation7 + $0x188] sm:$0xff]
    %v132 = vld [vmem:[#allocation7 + $0x190] sm:$0xff]
    %v133 = vld [vmem:[#allocation7 + $0x198] sm:$0xff]
    %v134 = vld [vmem:[#allocation7 + $0x1a0] sm:$0xff]
    %v135 = vld [vmem:[#allocation7 + $0x1a8] sm:$0xff]
    %v136 = vld [vmem:[#allocation7 + $0x1b0] sm:$0xff]
    %v137 = vld [vmem:[#allocation7 + $0x1b8] sm:$0xff]
    %v138 = vld [vmem:[#allocation7 + $0x1c0] sm:$0xff]
    %v139 = vld [vmem:[#allocation7 + $0x1c8] sm:$0xff]
    %v140 = vld [vmem:[#allocation7 + $0x1d0] sm:$0xff]
    %v141 = vld [vmem:[#allocation7 + $0x1d8] sm:$0xff]
    %v142 = vld [vmem:[#allocation7 + $0x1e0] sm:$0xff]
    %v143 = vld [vmem:[#allocation7 + $0x1e8] sm:$0xff]
    %v144 = vld [vmem:[#allocation7 + $0x1f0] sm:$0xff]
    %v145 = vld [vmem:[#allocation7 + $0x1f8] sm:$0xff]
    %146 = vmatprep.subr.mxu0 0.0
    %147 = vmatpush1.msra.mxu0 %v97
    %148 = vmatprep.subr.mxu0 0.0
    %149 = vmatpush1.msra.mxu0 %v96
    %150 = vmatprep.subr.mxu0 0.0
    %151 = vmatpush1.msra.mxu0 %v95
    %152 = vmatprep.subr.mxu0 0.0
    %153 = vmatpush1.msra.mxu0 %v94
    %154 = vmatprep.subr.mxu0 0.0
    %155 = vmatpush1.msra.mxu0 %v93
    %156 = vmatprep.subr.mxu0 0.0
    %157 = vmatpush1.msra.mxu0 %v92
    %158 = vmatprep.subr.mxu0 0.0
    %159 = vmatpush1.msra.mxu0 %v91
    %160 = vmatprep.subr.mxu0 0.0
    %161 = vmatpush1.msra.mxu0 %v90
    %162 = vmatprep.subr.mxu0 0.0
    %163 = vmatpush1.msra.mxu0 %v89
    %164 = vmatprep.subr.mxu0 0.0
    %165 = vmatpush1.msra.mxu0 %v88
    %166 = vmatprep.subr.mxu0 0.0
    %167 = vmatpush1.msra.mxu0 %v87
    %168 = vmatprep.subr.mxu0 0.0
    %169 = vmatpush1.msra.mxu0 %v86
    %170 = vmatprep.subr.mxu0 0.0
    %171 = vmatpush1.msra.mxu0 %v85
    %172 = vmatprep.subr.mxu0 0.0
    %173 = vmatpush1.msra.mxu0 %v84
    %174 = vmatprep.subr.mxu0 0.0
    %175 = vmatpush1.msra.mxu0 %v83
    %176 = vmatprep.subr.mxu0 0.0
    %177 = vmatpush1.msra.mxu0 %v82
    %178 = vmatprep.subr.mxu0 0.0
    %179 = vmatpush2.msra.mxu0 %v113
    %180 = vmatprep.subr.mxu0 0.0
    %181 = vmatpush2.msra.mxu0 %v112
    %182 = vmatprep.subr.mxu0 0.0
    %183 = vmatpush2.msra.mxu0 %v111
    %184 = vmatprep.subr.mxu0 0.0
    %185 = vmatpush2.msra.mxu0 %v110
    %186 = vmatprep.subr.mxu0 0.0
    %187 = vmatpush2.msra.mxu0 %v109
    %188 = vmatprep.subr.mxu0 0.0
    %189 = vmatpush2.msra.mxu0 %v108
    %190 = vmatprep.subr.mxu0 0.0
    %191 = vmatpush2.msra.mxu0 %v107
    %192 = vmatprep.subr.mxu0 0.0
    %193 = vmatpush2.msra.mxu0 %v106
    %194 = vmatprep.subr.mxu0 0.0
    %195 = vmatpush2.msra.mxu0 %v105
    %196 = vmatprep.subr.mxu0 0.0
    %197 = vmatpush2.msra.mxu0 %v104
    %198 = vmatprep.subr.mxu0 0.0
    %199 = vmatpush2.msra.mxu0 %v103
    %200 = vmatprep.subr.mxu0 0.0
    %201 = vmatpush2.msra.mxu0 %v102
    %202 = vmatprep.subr.mxu0 0.0
    %203 = vmatpush2.msra.mxu0 %v101
    %204 = vmatprep.subr.mxu0 0.0
    %205 = vmatpush2.msra.mxu0 %v100
    %206 = vmatprep.subr.mxu0 0.0
    %207 = vmatpush2.msra.mxu0 %v99
    %208 = vmatprep.subr.mxu0 0.0
    %209 = vmatpush2.msra.mxu0 %v98
    %210 = vmatprep.mubr.f32.mxu0 %v79
    %211 = vmatmul.mubr.f32.gmra.mxu0 %v78
    %v212 = vpop.f32.mrf.mxu0
    %v213 = vadd.f32 0.0, %v212
    %v214 = vpop.f32.mrf.mxu0
    %215 = vdwg.mxu0
    %216 = vmatprep.subr.mxu0 0.0
    %217 = vmatpush1.msra.mxu0 %v129
    %218 = vmatprep.subr.mxu0 0.0
    %219 = vmatpush1.msra.mxu0 %v128
    %220 = vmatprep.subr.mxu0 0.0
    %221 = vmatpush1.msra.mxu0 %v127
    %222 = vmatprep.subr.mxu0 0.0
    %223 = vmatpush1.msra.mxu0 %v126
    %224 = vmatprep.subr.mxu0 0.0
    %225 = vmatpush1.msra.mxu0 %v125
    %226 = vmatprep.subr.mxu0 0.0
    %227 = vmatpush1.msra.mxu0 %v124
    %228 = vmatprep.subr.mxu0 0.0
    %229 = vmatpush1.msra.mxu0 %v123
    %230 = vmatprep.subr.mxu0 0.0
    %231 = vmatpush1.msra.mxu0 %v122
    %232 = vmatprep.subr.mxu0 0.0
    %233 = vmatpush1.msra.mxu0 %v121
    %234 = vmatprep.subr.mxu0 0.0
    %235 = vmatpush1.msra.mxu0 %v120
    %236 = vmatprep.subr.mxu0 0.0
    %237 = vmatpush1.msra.mxu0 %v119
    %238 = vmatprep.subr.mxu0 0.0
    %239 = vmatpush1.msra.mxu0 %v118
    %240 = vmatprep.subr.mxu0 0.0
    %241 = vmatpush1.msra.mxu0 %v117
    %242 = vmatprep.subr.mxu0 0.0
    %243 = vmatpush1.msra.mxu0 %v116
    %244 = vmatprep.subr.mxu0 0.0
    %245 = vmatpush1.msra.mxu0 %v115
    %246 = vmatprep.subr.mxu0 0.0
    %247 = vmatpush1.msra.mxu0 %v114
    %248 = vmatprep.subr.mxu0 0.0
    %249 = vmatpush2.msra.mxu0 %v145
    %250 = vmatprep.subr.mxu0 0.0
    %251 = vmatpush2.msra.mxu0 %v144
    %252 = vmatprep.subr.mxu0 0.0
    %253 = vmatpush2.msra.mxu0 %v143
    %254 = vmatprep.subr.mxu0 0.0
    %255 = vmatpush2.msra.mxu0 %v142
    %256 = vmatprep.subr.mxu0 0.0
    %257 = vmatpush2.msra.mxu0 %v141
    %258 = vmatprep.subr.mxu0 0.0
    %259 = vmatpush2.msra.mxu0 %v140
    %260 = vmatprep.subr.mxu0 0.0
    %261 = vmatpush2.msra.mxu0 %v139
    %262 = vmatprep.subr.mxu0 0.0
    %263 = vmatpush2.msra.mxu0 %v138
    %264 = vmatprep.subr.mxu0 0.0
    %265 = vmatpush2.msra.mxu0 %v137
    %266 = vmatprep.subr.mxu0 0.0
    %267 = vmatpush2.msra.mxu0 %v136
    %268 = vmatprep.subr.mxu0 0.0
    %269 = vmatpush2.msra.mxu0 %v135
    %270 = vmatprep.subr.mxu0 0.0
    %271 = vmatpush2.msra.mxu0 %v134
    %272 = vmatprep.subr.mxu0 0.0
    %273 = vmatpush2.msra.mxu0 %v133
    %274 = vmatprep.subr.mxu0 0.0
    %275 = vmatpush2.msra.mxu0 %v132
    %276 = vmatprep.subr.mxu0 0.0
    %277 = vmatpush2.msra.mxu0 %v131
    %278 = vmatprep.subr.mxu0 0.0
    %279 = vmatpush2.msra.mxu0 %v130
    %280 = vmatprep.mubr.f32.mxu0 %v81
    %281 = vmatmul.mubr.f32.gmra.mxu0 %v80
    %v282 = vpop.f32.mrf.mxu0
    %v283 = vadd.f32 %v213, %v282
    %v284 = vpop.f32.mrf.mxu0
    %285 = vdwg.mxu0
    %286 = vst [vmem:[#allocation8] sm:$0xff] %v283
    // Predicated region
    $region26: #{tpu_custom_call.1} parent=1 // pred_check
      _
    $region27: #{tpu_custom_call.1} parent=1 // pred_check_branch
      %288 = sbr.rel (0) target = $region29
    $region28: #{tpu_custom_call.1} parent=1 // pred_region
      %s290 = ssub.s32 128, 128
      %291 = vsyncadd [#allocation4], %s290
      %s293 = sshll.u32 [#allocation8], 4
      %s294 = int_to_ptr.vmem [resolvable:$true] %s293
      %296 = dma.vmem_to_hbm [thread:$0]  %s294, 128, %s3, [#allocation4]
    $region29: #{tpu_custom_call.1} parent=1 // pred_fallthru
      _
    // Predicated region
    $region30: #{tpu_custom_call.1} parent=1 // pred_check
      _
    $region31: #{tpu_custom_call.1} parent=1 // pred_check_branch
      %298 = sbr.rel (0) target = $region33
    $region32: #{tpu_custom_call.1} parent=1 // pred_region
      %299 = dma.done [#allocation4], 128
    $region33: #{tpu_custom_call.1} parent=1 // pred_fallthru
      _
    %300 = vsyncpa [#allocation3], 1
    %301 = vsyncpa [#allocation6], 1
    %302 = vsyncpa [#allocation4], 1

</llo_original>
